<compile_context>
chip_gen: v6e
topology: v6e:2x2x1
jax: 0.10.0
libtpu: 0.0.40
codegen_flags: <defaults>
</compile_context>

<pallas_src>
import functools
import math

import jax
import jax.numpy as jnp
from jax import lax
from jax.experimental import pallas as pl
from jax.experimental.pallas import tpu as pltpu


def _round_up(v, m):
    return (v + m - 1) // m * m


def _ceil_div(a, b):
    return -(-a // b)


@functools.lru_cache(maxsize=None)
def _vmem_capacity_bytes():
    try:
        return int(pltpu.get_tpu_info().vmem_capacity_bytes)
    except Exception:
        return 64 * 1024 * 1024  # conservative fallback (v7x per-TC VMEM)


def _pick_tile(dim, pref, mult):
    """Largest tile <= ~pref (a multiple of `mult`) that minimizes padding."""
    if dim <= pref:
        return _round_up(dim, mult)
    nblocks = _ceil_div(dim, pref)
    return _round_up(_ceil_div(dim, nblocks), mult)


def _eq_linear_kernel_single(x_ref, w_ref, b_ref, o_ref, *, scale):
    """K fits a single tile: no accumulator scratch, one fused write."""
    acc = lax.dot_general(
        x_ref[...], w_ref[...],
        dimension_numbers=(((1,), (1,)), ((), ())),  # x @ W.T (native W layout)
        preferred_element_type=jnp.float32)
    o_ref[...] = (acc * jnp.float32(scale)
                  + b_ref[...].astype(jnp.float32)).astype(o_ref.dtype)


def _eq_linear_kernel_multi(x_ref, w_ref, b_ref, o_ref, acc_ref, *, scale):
    """Grid axis 2 walks K; acc_ref is the resident f32 VMEM accumulator."""
    k = pl.program_id(2)
    part = lax.dot_general(
        x_ref[...], w_ref[...],
        dimension_numbers=(((1,), (1,)), ((), ())),  # x @ W.T (native W layout)
        preferred_element_type=jnp.float32)

    @pl.when(k == 0)
    def _():
        acc_ref[...] = part          # direct write: no zero-init + RMW

    @pl.when(k > 0)
    def _():
        acc_ref[...] += part

    @pl.when(k == pl.num_programs(2) - 1)
    def _():
        o_ref[...] = (acc_ref[...] * jnp.float32(scale)
                      + b_ref[...].astype(jnp.float32)).astype(o_ref.dtype)


@jax.jit
def equalized_linear(x, weight, bias):
    """y = x @ (weight * c).T + bias with c = 1/sqrt(in_features).

    x:      (..., in_features)
    weight: (out_features, in_features)   -- raw parameter, scale in epilogue
    bias:   (out_features,)
    """
    out_features, in_features = weight.shape
    scale = 1.0 / math.sqrt(in_features)

    orig_lead = x.shape[:-1]
    x2 = x.reshape(-1, in_features)
    m, k_dim = x2.shape
    n = out_features

    # Explicit compute dtype: follow the activations (keeps bf16 on the MXU,
    # avoids silent mixed-dtype promotion deciding the precision).
    compute_dtype = x.dtype
    cbytes = jnp.dtype(compute_dtype).itemsize
    obytes = jnp.dtype(x.dtype).itemsize
    row_mult = 16 if cbytes == 2 else 8  # sublane packing for sub-32-bit dtypes

    vmem_cap = _vmem_capacity_bytes()
    # Bigger N tiles on 128-MiB-VMEM parts (v5e/v6e); 1024 is v7x-safe.
    tn_pref = 2048 if vmem_cap >= 128 * 1024 * 1024 else 1024
    tm_pref, tk_pref = 512, 512

    tm = _pick_tile(m, tm_pref, row_mult)
    tn = _pick_tile(n, tn_pref, 128)
    tk = _pick_tile(k_dim, tk_pref, 128)

    mp = _round_up(m, tm)
    np_ = _round_up(n, tn)
    kp = _round_up(k_dim, tk)

    # Megacore (v7x has 2 TCs): if the whole output would be one block, split N
    # so >= 2 "parallel" blocks exist. Keeps tiles >=256-wide (lane-dense).
    if mp // tm == 1 and np_ // tn == 1 and np_ >= 512:
        tn = _round_up(_ceil_div(np_, 2), 128)
        np_ = _round_up(n, tn)

    # Zero-pad only the dims that need it; for tile-aligned production shapes
    # this is a no-op, and the weight never gets a transposed HBM copy.
    x_p = x2.astype(compute_dtype)
    if (mp, kp) != (m, k_dim):
        x_p = jnp.pad(x_p, ((0, mp - m), (0, kp - k_dim)))
    w_p = weight.astype(compute_dtype)
    if (np_, kp) != (n, k_dim):
        w_p = jnp.pad(w_p, ((0, np_ - n), (0, kp - k_dim)))
    b_p = bias.reshape(1, -1)
    if np_ != n:
        b_p = jnp.pad(b_p, ((0, 0), (0, np_ - n)))

    grid = (mp // tm, np_ // tn, kp // tk)

    if grid[2] == 1:
        kernel = functools.partial(_eq_linear_kernel_single, scale=scale)
        scratch_shapes = []
    else:
        kernel = functools.partial(_eq_linear_kernel_multi, scale=scale)
        scratch_shapes = [pltpu.VMEM((tm, tn), jnp.float32)]

    # Resident footprint: double-buffered x/W/bias/out tiles + f32 accumulator.
    footprint = (2 * (tm * tk + tn * tk) * cbytes
                 + 2 * tn * 4
                 + 2 * tm * tn * obytes
                 + tm * tn * 4)
    vmem_limit = int(max(32 * 1024 * 1024,
                         min(vmem_cap - 16 * 1024 * 1024, 2 * footprint)))

    cost = pl.CostEstimate(
        flops=2 * m * n * k_dim,
        transcendentals=0,
        bytes_accessed=(m * k_dim * cbytes + n * k_dim * cbytes
                        + n * 4 + m * n * obytes))

    out_p = pl.pallas_call(
        kernel,
        out_shape=jax.ShapeDtypeStruct((mp, np_), x.dtype),
        grid_spec=pltpu.PrefetchScalarGridSpec(
            num_scalar_prefetch=0,
            grid=grid,
            in_specs=[
                pl.BlockSpec((tm, tk), lambda i, j, k: (i, k)),   # x tile
                pl.BlockSpec((tn, tk), lambda i, j, k: (j, k)),   # W (native layout)
                pl.BlockSpec((1, tn), lambda i, j, k: (0, j)),    # bias tile
            ],
            out_specs=pl.BlockSpec((tm, tn), lambda i, j, k: (i, j)),
            scratch_shapes=scratch_shapes,
        ),
        compiler_params=pltpu.CompilerParams(
            # M/N tiles independent -> megacore-shardable; K is the reduction
            # axis with the resident accumulator.
            dimension_semantics=("parallel", "parallel", "arbitrary"),
            vmem_limit_bytes=vmem_limit,
        ),
        cost_estimate=cost,
    )(x_p, w_p, b_p)

    out = out_p[:m, :n]
    return out.reshape(*orig_lead, out_features)


def _reference(x, weight, bias):
    """Pure-JAX reproduction of the PyTorch forward, for verification."""
    c = 1.0 / math.sqrt(weight.shape[1])
    return (x.astype(jnp.float32) @ (weight.astype(jnp.float32) * c).T
            + bias.astype(jnp.float32)).astype(x.dtype)


if __name__ == "__main__":
    key = jax.random.PRNGKey(0)
    kx, kw, kx2, kw2 = jax.random.split(key, 4)

    # Small shapes consistent with the module: batch=2, in=32, out=16.
    batch, in_features, out_features = 2, 32, 16
    x = jax.random.normal(kx, (batch, in_features), dtype=jnp.float32)
    weight = jax.random.normal(kw, (out_features, in_features), dtype=jnp.float32)
    # Module init: bias = ones(out_features) * bias_value (0.2 exercises the
    # bias-add path; the PyTorch default value is 0.0).
    bias = jnp.ones((out_features,), dtype=jnp.float32) * 0.2

    out = jax.block_until_ready(equalized_linear(x, weight, bias))
    ref = _reference(x, weight, bias)
    assert out.shape == (batch, out_features), out.shape
    assert out.dtype == x.dtype
    assert jnp.allclose(out, ref, rtol=1e-5, atol=1e-5), (
        float(jnp.max(jnp.abs(out - ref))))

    # Smoke-test the multi-K accumulation path (K > tk -> 2 K steps). Loose
    # tolerance: only guards against structural/indexing bugs, not matmul
    # precision-mode differences between XLA and Mosaic.
    x2 = jax.random.normal(kx2, (4, 640), dtype=jnp.float32)
    w2 = jax.random.normal(kw2, (16, 640), dtype=jnp.float32)
    b2 = jnp.zeros((16,), dtype=jnp.float32)
    out2 = jax.block_until_ready(equalized_linear(x2, w2, b2))
    ref2 = _reference(x2, w2, b2)
    assert jnp.allclose(out2, ref2, rtol=2e-2, atol=2e-2), (
        float(jnp.max(jnp.abs(out2 - ref2))))

    print("KERNEL_OK")
</pallas_src>

<mosaic_0001>
module attributes {stable_mosaic.version = 11 : i64} {
  func.func @_eq_linear_kernel_single(%arg0: i32, %arg1: i32, %arg2: i32, %arg3: memref<8x128xf32, #tpu.memory_space<vmem>>, %arg4: memref<128x128xf32, #tpu.memory_space<vmem>>, %arg5: memref<1x128xf32, #tpu.memory_space<vmem>>, %arg6: memref<8x128xf32, #tpu.memory_space<vmem>>) attributes {dimension_semantics = [#tpu.dimension_semantics<parallel>, #tpu.dimension_semantics<parallel>, #tpu.dimension_semantics<arbitrary>], iteration_bounds = array<i64: 1, 1, 1>, scalar_prefetch = 0 : i64, scratch_operands = 0 : i64, tpu.core_type = #tpu.core_type<tc>, window_params = [{transform_indices = @transform_0, window_bounds = array<i64: 8, 128>}, {transform_indices = @transform_1, window_bounds = array<i64: 128, 128>}, {transform_indices = @transform_2, window_bounds = array<i64: 1, 128>}, {transform_indices = @transform_3, window_bounds = array<i64: 8, 128>}]} {
    %c0 = arith.constant 0 : index
    %c0_0 = arith.constant 0 : index
    %0 = vector.load %arg3[%c0, %c0_0] : memref<8x128xf32, #tpu.memory_space<vmem>>, vector<8x128xf32>
    %c0_1 = arith.constant 0 : index
    %c0_2 = arith.constant 0 : index
    %1 = vector.load %arg4[%c0_1, %c0_2] : memref<128x128xf32, #tpu.memory_space<vmem>>, vector<128x128xf32>
    %cst = arith.constant dense<0.000000e+00> : vector<8x128xf32>
    %2 = tpu.matmul %0, %1, %cst {dimension_numbers = #tpu.dot_dimension_numbers<[1], [1], [0], [0], [0, 0, 1, 0], [], []>} : vector<8x128xf32>, vector<128x128xf32>, vector<8x128xf32> -> vector<8x128xf32>
    %cst_3 = arith.constant 0.176776692 : f32
    %3 = vector.broadcast %cst_3 : f32 to vector<8x128xf32>
    %4 = arith.mulf %2, %3 : vector<8x128xf32>
    %c0_4 = arith.constant 0 : index
    %c0_5 = arith.constant 0 : index
    %5 = vector.load %arg5[%c0_4, %c0_5] : memref<1x128xf32, #tpu.memory_space<vmem>>, vector<1x128xf32>
    %6 = vector.broadcast %5 : vector<1x128xf32> to vector<8x128xf32>
    %7 = arith.addf %4, %6 : vector<8x128xf32>
    %c0_6 = arith.constant 0 : index
    %c0_7 = arith.constant 0 : index
    %8 = vector.load %arg6[%c0_6, %c0_7] : memref<8x128xf32, #tpu.memory_space<vmem>>, vector<8x128xf32>
    tpu.vector_store %arg6[%c0_6, %c0_7], %7 {strides = array<i32>} : memref<8x128xf32, #tpu.memory_space<vmem>>, vector<8x128xf32>,
    return
  }
  func.func @transform_0(%arg0: i32, %arg1: i32, %arg2: i32) -> (i32, i32) {
    %c0_i32 = arith.constant 0 : i32
    return %arg0, %arg2 : i32, i32
  }
  func.func @transform_1(%arg0: i32, %arg1: i32, %arg2: i32) -> (i32, i32) {
    %c0_i32 = arith.constant 0 : i32
    return %arg1, %arg2 : i32, i32
  }
  func.func @transform_2(%arg0: i32, %arg1: i32, %arg2: i32) -> (i32, i32) {
    %c0_i32 = arith.constant 0 : i32
    %c0_i32_0 = arith.constant 0 : i32
    return %c0_i32, %arg1 : i32, i32
  }
  func.func @transform_3(%arg0: i32, %arg1: i32, %arg2: i32) -> (i32, i32) {
    %c0_i32 = arith.constant 0 : i32
    return %arg0, %arg1 : i32, i32
  }
}

</mosaic_0001>

<llo_original>
// kernel: equalized_linear.1
$region0: #{equalized_linear.1}
  #allocation0 [shape = 'u32[]', space=smem, size = 0x4, offset = 0x4, fixed_abs, tag = 'smem constant byte address 0x4 - core index']
  #allocation1 [shape = 'u32[144,128]{1,0:T(1,128)}', space=vmem, size = 0x12000, scoped, tag = 'internal scratch']
  %s0 = inlined_call_operand.vmem [shape: f32[8,128], index: 0, kind: input, shape index: {}]
  %s1 = inlined_call_operand.vmem [shape: f32[128,128], index: 1, kind: input, shape index: {}]
  %s2 = inlined_call_operand.vmem [shape: f32[1,128], index: 2, kind: input, shape index: {}]
  %s3 = inlined_call_operand.vmem [shape: f32[8,128], index: 3, kind: output, shape index: {}]
  %s4 = sld [smem:[#allocation0]]
  $region22: #{equalized_linear.1} parent=0
    _
  %s6 = ssub.s32 1, %s4
  %s7 = scalar_select 0, %s6, %s4
  // Predicated region
  $region2: #{equalized_linear.1} parent=0 // pred_check
    _
  $region3: #{equalized_linear.1} parent=0 // pred_check_branch
    %9 = sbr.rel (0) target = $region5
  $region4: #{equalized_linear.1} parent=0 // pred_region
    _
  $region5: #{equalized_linear.1} parent=0 // pred_fallthru
    _
  // Predicated region
  $region6: #{equalized_linear.1} parent=0 // pred_check
    _
  $region7: #{equalized_linear.1} parent=0 // pred_check_branch
    %11 = sbr.rel (0) target = $region9
  $region8: #{equalized_linear.1} parent=0 // pred_region
    _
  $region9: #{equalized_linear.1} parent=0 // pred_fallthru
    _
  // Predicated region
  $region10: #{equalized_linear.1} parent=0 // pred_check
    _
  $region11: #{equalized_linear.1} parent=0 // pred_check_branch
    %13 = sbr.rel (0) target = $region13
  $region12: #{equalized_linear.1} parent=0 // pred_region
    _
  $region13: #{equalized_linear.1} parent=0 // pred_fallthru
    _
  %v14 = vld [vmem:[%s0] sm:$0xff]
  %v15 = vld [vmem:[%s1] sm:$0xff]
  %v16 = vld [vmem:[%s1 + $0x8] sm:$0xff]
  %v17 = vld [vmem:[%s1 + $0x10] sm:$0xff]
  %v18 = vld [vmem:[%s1 + $0x18] sm:$0xff]
  %v19 = vld [vmem:[%s1 + $0x20] sm:$0xff]
  %v20 = vld [vmem:[%s1 + $0x28] sm:$0xff]
  %v21 = vld [vmem:[%s1 + $0x30] sm:$0xff]
  %v22 = vld [vmem:[%s1 + $0x38] sm:$0xff]
  %v23 = vld [vmem:[%s1 + $0x40] sm:$0xff]
  %v24 = vld [vmem:[%s1 + $0x48] sm:$0xff]
  %v25 = vld [vmem:[%s1 + $0x50] sm:$0xff]
  %v26 = vld [vmem:[%s1 + $0x58] sm:$0xff]
  %v27 = vld [vmem:[%s1 + $0x60] sm:$0xff]
  %v28 = vld [vmem:[%s1 + $0x68] sm:$0xff]
  %v29 = vld [vmem:[%s1 + $0x70] sm:$0xff]
  %v30 = vld [vmem:[%s1 + $0x78] sm:$0xff]
  %31 = vmatprep.subr.mxu0 0.0
  %32 = vmatpush1.xpose.msra.mxu0 %v30
  %33 = vmatprep.subr.mxu0 0.0
  %34 = vmatpush1.xpose.msra.mxu0 %v29
  %35 = vmatprep.subr.mxu0 0.0
  %36 = vmatpush1.xpose.msra.mxu0 %v28
  %37 = vmatprep.subr.mxu0 0.0
  %38 = vmatpush1.xpose.msra.mxu0 %v27
  %39 = vmatprep.subr.mxu0 0.0
  %40 = vmatpush1.xpose.msra.mxu0 %v26
  %41 = vmatprep.subr.mxu0 0.0
  %42 = vmatpush1.xpose.msra.mxu0 %v25
  %43 = vmatprep.subr.mxu0 0.0
  %44 = vmatpush1.xpose.msra.mxu0 %v24
  %45 = vmatprep.subr.mxu0 0.0
  %46 = vmatpush1.xpose.msra.mxu0 %v23
  %47 = vmatprep.subr.mxu0 0.0
  %48 = vmatpush1.xpose.msra.mxu0 %v22
  %49 = vmatprep.subr.mxu0 0.0
  %50 = vmatpush1.xpose.msra.mxu0 %v21
  %51 = vmatprep.subr.mxu0 0.0
  %52 = vmatpush1.xpose.msra.mxu0 %v20
  %53 = vmatprep.subr.mxu0 0.0
  %54 = vmatpush1.xpose.msra.mxu0 %v19
  %55 = vmatprep.subr.mxu0 0.0
  %56 = vmatpush1.xpose.msra.mxu0 %v18
  %57 = vmatprep.subr.mxu0 0.0
  %58 = vmatpush1.xpose.msra.mxu0 %v17
  %59 = vmatprep.subr.mxu0 0.0
  %60 = vmatpush1.xpose.msra.mxu0 %v16
  %61 = vmatprep.subr.mxu0 0.0
  %62 = vmatpush1.xpose.msra.mxu0 %v15
  %63 = vmatprep.subr.mxu0 0.0
  %64 = vmatpush2.xpose.msra.mxu0 0.0
  %65 = vmatprep.subr.mxu0 0.0
  %66 = vmatpush2.xpose.msra.mxu0 0.0
  %67 = vmatprep.subr.mxu0 0.0
  %68 = vmatpush2.xpose.msra.mxu0 0.0
  %69 = vmatprep.subr.mxu0 0.0
  %70 = vmatpush2.xpose.msra.mxu0 0.0
  %71 = vmatprep.subr.mxu0 0.0
  %72 = vmatpush2.xpose.msra.mxu0 0.0
  %73 = vmatprep.subr.mxu0 0.0
  %74 = vmatpush2.xpose.msra.mxu0 0.0
  %75 = vmatprep.subr.mxu0 0.0
  %76 = vmatpush2.xpose.msra.mxu0 0.0
  %77 = vmatprep.subr.mxu0 0.0
  %78 = vmatpush2.xpose.msra.mxu0 0.0
  %79 = vmatprep.subr.mxu0 0.0
  %80 = vmatpush2.xpose.msra.mxu0 0.0
  %81 = vmatprep.subr.mxu0 0.0
  %82 = vmatpush2.xpose.msra.mxu0 0.0
  %83 = vmatprep.subr.mxu0 0.0
  %84 = vmatpush2.xpose.msra.mxu0 0.0
  %85 = vmatprep.subr.mxu0 0.0
  %86 = vmatpush2.xpose.msra.mxu0 0.0
  %87 = vmatprep.subr.mxu0 0.0
  %88 = vmatpush2.xpose.msra.mxu0 0.0
  %89 = vmatprep.subr.mxu0 0.0
  %90 = vmatpush2.xpose.msra.mxu0 0.0
  %91 = vmatprep.subr.mxu0 0.0
  %92 = vmatpush2.xpose.msra.mxu0 0.0
  %93 = vmatprep.subr.mxu0 0.0
  %94 = vmatpush2.xpose.msra.mxu0 0.0
  %95 = vmatprep.mubr.f32.mxu0 0.0
  %96 = vmatmul.mubr.f32.gmra.mxu0 %v14
  %v97 = vpop.f32.mrf.mxu0
  %v98 = vadd.f32 0.0, %v97
  %v99 = vpop.f32.mrf.mxu0
  %100 = vdwg.mxu0
  %v101 = vmul.f32 %v98, 0.17677669
  %v102 = vld [vmem:[%s2] sm:$0x1]
  %v104 = vlaneseq
  %v105 = vshrl.u32 %v104, 7
  %v106 = vsub.s32 0, %v105
  %v107 = vrot.slane %v102, %v106
  %v109 = vadd.f32 %v101, %v107
  %110 = vst [vmem:[%s3] sm:$0xff] %v109
  // Predicated region
  $region14: #{equalized_linear.1} parent=0 // pred_check
    _
  $region15: #{equalized_linear.1} parent=0 // pred_check_branch
    %112 = sbr.rel (0) target = $region17
  $region16: #{equalized_linear.1} parent=0 // pred_region
    _
  $region17: #{equalized_linear.1} parent=0 // pred_fallthru
    _
  // Predicated region
  $region18: #{equalized_linear.1} parent=0 // pred_check
    _
  $region19: #{equalized_linear.1} parent=0 // pred_check_branch
    %114 = sbr.rel (0) target = $region21
  $region20: #{equalized_linear.1} parent=0 // pred_region
    _
  $region21: #{equalized_linear.1} parent=0 // pred_fallthru
    _

</llo_original>
